<compile_context>
chip_gen: v7x
topology: tpu7x:2x2x1
jax: 0.10.0
libtpu: 0.0.40
codegen_flags: <defaults>
</compile_context>

<pallas_src>
import jax
import jax.numpy as jnp
from jax.experimental import pallas as pl
from jax.experimental.pallas import tpu as pltpu

_LANE = 128


def dream_mlp_kernel(x_ref, w_ref, b_ref, out_ref):
    # One MXU pass: (TM, E) @ (E, 2E + Lpad) with f32 accumulation,
    # f32 bias add, single lane-dense store.
    acc = jnp.dot(x_ref[...], w_ref[...], preferred_element_type=jnp.float32)
    out_ref[...] = (acc + b_ref[...]).astype(out_ref.dtype)


def prepare_params(wm, bm, wl, bl, wi, bi):
    """Fuse PyTorch-layout (out, in) weights ONCE into a single kernel weight.

    Returns:
      w_fused: (E, 2E + Lpad)  in the weight dtype
      b_fused: (1, 2E + Lpad)  in f32
    Amortized across calls; the per-call wrapper does no transposes/reshapes.
    """
    E = wm.shape[1]
    L = wi.shape[0]
    l_pad = ((L + _LANE - 1) // _LANE) * _LANE

    wm_t = wm.T.astype(jnp.float32)                      # (E, E)
    wl_t = wl.T.astype(jnp.float32)                      # (E, E)
    wi_t = wi.T.astype(jnp.float32)                      # (E, L)

    # lang_iden = (x @ Wl^T + bl) @ Wi^T + bi
    #           =  x @ (Wl^T @ Wi^T) + (bl @ Wi^T + bi)
    wc = wl_t @ wi_t                                     # (E, L)
    bc = bl.astype(jnp.float32) @ wi_t + bi.astype(jnp.float32)  # (L,)

    wc_pad = jnp.zeros((E, l_pad), jnp.float32).at[:, :L].set(wc)
    bc_pad = jnp.zeros((l_pad,), jnp.float32).at[:L].set(bc)

    w_fused = jnp.concatenate([wm_t, wl_t, wc_pad], axis=1).astype(wm.dtype)
    b_fused = jnp.concatenate(
        [bm.astype(jnp.float32), bl.astype(jnp.float32), bc_pad]
    ).reshape(1, 2 * E + l_pad)
    return w_fused, b_fused


def dream_mlp(x, w_fused, b_fused, emb_size, lang_num):
    """x: (B, E). Returns (meaning_emb, lang_emb, lang_iden)."""
    B, E = x.shape
    N = w_fused.shape[1]

    # Row tile: one tile at small B; 256-row tiles for large batches so the
    # batch grid axis can shard across TensorCores (v7x) and double-buffer.
    if B <= 256 or (B % 256) != 0:
        tm = B
    else:
        tm = 256
    grid = (B // tm,)

    out = pl.pallas_call(
        dream_mlp_kernel,
        out_shape=jax.ShapeDtypeStruct((B, N), x.dtype),
        grid=grid,
        in_specs=[
            pl.BlockSpec((tm, E), lambda i: (i, 0)),   # x rows
            pl.BlockSpec((E, N), lambda i: (0, 0)),    # fused weight (resident)
            pl.BlockSpec((1, N), lambda i: (0, 0)),    # fused bias   (resident)
        ],
        out_specs=pl.BlockSpec((tm, N), lambda i: (i, 0)),
        compiler_params=pltpu.CompilerParams(
            dimension_semantics=("parallel",),
        ),
    )(x, w_fused, b_fused)

    # Static, lane-aligned splits of the single output slab.
    meaning_emb = out[:, :emb_size]
    lang_emb = out[:, emb_size:2 * emb_size]
    lang_iden = out[:, 2 * emb_size:2 * emb_size + lang_num]
    return meaning_emb, lang_emb, lang_iden


def init_params(key, emb_size, lang_num, dtype=jnp.float32):
    """Deterministic synthetic parameters (PyTorch Linear shape conventions)."""
    ks = jax.random.split(key, 6)
    scale = 1.0 / jnp.sqrt(emb_size)
    wm = jax.random.uniform(ks[0], (emb_size, emb_size), dtype, -scale, scale)
    bm = jax.random.uniform(ks[1], (emb_size,), dtype, -scale, scale)
    wl = jax.random.uniform(ks[2], (emb_size, emb_size), dtype, -scale, scale)
    bl = jax.random.uniform(ks[3], (emb_size,), dtype, -scale, scale)
    wi = jax.random.uniform(ks[4], (lang_num, emb_size), dtype, -scale, scale)
    bi = jax.random.uniform(ks[5], (lang_num,), dtype, -scale, scale)
    return wm, bm, wl, bl, wi, bi


if __name__ == "__main__":
    # Small shapes consistent with the module: emb_size=128, lang_num=7, batch=8.
    B, E, L = 8, 128, 7
    key = jax.random.PRNGKey(0)
    kx, kp = jax.random.split(key)
    x = jax.random.normal(kx, (B, E), jnp.float32)
    wm, bm, wl, bl, wi, bi = init_params(kp, E, L)

    # One-time parameter fusion (amortized across calls).
    w_fused, b_fused = prepare_params(wm, bm, wl, bl, wi, bi)

    meaning_emb, lang_emb, lang_iden = dream_mlp(x, w_fused, b_fused, E, L)
    jax.block_until_ready((meaning_emb, lang_emb, lang_iden))

    # Reference check against plain JAX (same semantics as the PyTorch forward).
    ref_meaning = x @ wm.T + bm
    ref_lang = x @ wl.T + bl
    ref_iden = ref_lang @ wi.T + bi
    assert meaning_emb.shape == (B, E)
    assert lang_emb.shape == (B, E)
    assert lang_iden.shape == (B, L)
    assert jnp.allclose(meaning_emb, ref_meaning, atol=1e-4, rtol=1e-4)
    assert jnp.allclose(lang_emb, ref_lang, atol=1e-4, rtol=1e-4)
    # lang_iden uses the precomputed Wl^T @ Wi^T fusion: differs from the
    # two-step reference only by f32 reassociation.
    assert jnp.allclose(lang_iden, ref_iden, atol=1e-3, rtol=1e-3)

    print("KERNEL_OK")
</pallas_src>

<mosaic_0001>
module attributes {stable_mosaic.version = 11 : i64} {
  func.func @dream_mlp_kernel(%arg0: i32, %arg1: memref<8x128xf32, #tpu.memory_space<vmem>>, %arg2: memref<128x384xf32, #tpu.memory_space<vmem>>, %arg3: memref<1x384xf32, #tpu.memory_space<vmem>>, %arg4: memref<8x384xf32, #tpu.memory_space<vmem>>) attributes {dimension_semantics = [#tpu.dimension_semantics<parallel>], iteration_bounds = array<i64: 1>, scalar_prefetch = 0 : i64, scratch_operands = 0 : i64, tpu.core_type = #tpu.core_type<tc>, window_params = [{transform_indices = @transform_0, window_bounds = array<i64: 8, 128>}, {pipeline_mode = #tpu.pipeline_mode<synchronous>, transform_indices = @transform_1, window_bounds = array<i64: 128, 384>}, {pipeline_mode = #tpu.pipeline_mode<synchronous>, transform_indices = @transform_2, window_bounds = array<i64: 1, 384>}, {transform_indices = @transform_3, window_bounds = array<i64: 8, 384>}]} {
    %c0 = arith.constant 0 : index
    %c0_0 = arith.constant 0 : index
    %0 = vector.load %arg1[%c0, %c0_0] : memref<8x128xf32, #tpu.memory_space<vmem>>, vector<8x128xf32>
    %c0_1 = arith.constant 0 : index
    %c0_2 = arith.constant 0 : index
    %1 = vector.load %arg2[%c0_1, %c0_2] : memref<128x384xf32, #tpu.memory_space<vmem>>, vector<128x384xf32>
    %cst = arith.constant dense<0.000000e+00> : vector<8x384xf32>
    %2 = tpu.matmul %0, %1, %cst {dimension_numbers = #tpu.dot_dimension_numbers<[1], [0], [0], [1], [0, 0, 1, 1], [], []>} : vector<8x128xf32>, vector<128x384xf32>, vector<8x384xf32> -> vector<8x384xf32>
    %c0_3 = arith.constant 0 : index
    %c0_4 = arith.constant 0 : index
    %3 = vector.load %arg3[%c0_3, %c0_4] : memref<1x384xf32, #tpu.memory_space<vmem>>, vector<1x384xf32>
    %4 = vector.broadcast %3 : vector<1x384xf32> to vector<8x384xf32>
    %5 = arith.addf %2, %4 : vector<8x384xf32>
    %c0_5 = arith.constant 0 : index
    %c0_6 = arith.constant 0 : index
    %6 = vector.load %arg4[%c0_5, %c0_6] : memref<8x384xf32, #tpu.memory_space<vmem>>, vector<8x384xf32>
    tpu.vector_store %arg4[%c0_5, %c0_6], %5 {strides = array<i32>} : memref<8x384xf32, #tpu.memory_space<vmem>>, vector<8x384xf32>,
    return
  }
  func.func @transform_0(%arg0: i32) -> (i32, i32) {
    %c0_i32 = arith.constant 0 : i32
    %c0_i32_0 = arith.constant 0 : i32
    return %arg0, %c0_i32 : i32, i32
  }
  func.func @transform_1(%arg0: i32) -> (i32, i32) {
    %c0_i32 = arith.constant 0 : i32
    %c0_i32_0 = arith.constant 0 : i32
    %c0_i32_1 = arith.constant 0 : i32
    return %c0_i32, %c0_i32_0 : i32, i32
  }
  func.func @transform_2(%arg0: i32) -> (i32, i32) {
    %c0_i32 = arith.constant 0 : i32
    %c0_i32_0 = arith.constant 0 : i32
    %c0_i32_1 = arith.constant 0 : i32
    return %c0_i32, %c0_i32_0 : i32, i32
  }
  func.func @transform_3(%arg0: i32) -> (i32, i32) {
    %c0_i32 = arith.constant 0 : i32
    %c0_i32_0 = arith.constant 0 : i32
    return %arg0, %c0_i32 : i32, i32
  }
}

</mosaic_0001>

<llo_original>
// kernel: tpu_custom_call.1
$region0: #{tpu_custom_call.1}
  #allocation0 [shape = 'u32[]', space=smem, size = 0x4, offset = 0x4, fixed_abs, tag = 'smem constant byte address 0x4 - core index']
  #allocation1 [shape = 'u32[144,128]{1,0:T(1,128)}', space=vmem, size = 0x12000, scoped, tag = 'internal scratch']
  %s0 = inlined_call_operand.hbm [shape: f32[8,128], index: 0, kind: input, shape index: {}]
  %s1 = inlined_call_operand.hbm [shape: f32[128,384], index: 1, kind: input, shape index: {}]
  %s2 = inlined_call_operand.vmem [shape: f32[1,384], index: 2, kind: input, shape index: {}]
  %s3 = inlined_call_operand.hbm [shape: f32[8,384], index: 3, kind: output, shape index: {}]
  %s4 = sld [smem:[#allocation0]]
  $region30: #{tpu_custom_call.1} parent=0
    _
  %s6 = ssub.s32 1, %s4
  %s7 = scalar_select 0, %s6, %s4
  $region1: #{tpu_custom_call.1} parent=0
    #allocation2 [shape = 'u8[4096]{0}', space=vmem, size = 0x1000, scoped, tag = 'input window, operand 0, single buffered']
    #allocation3 [shape = 's32[1]{0}', space=sflag, size = 0x4, scoped, tag = 'scoped memory for tpu_custom_call.1']
    #allocation4 [shape = 's32[1]{0}', space=sflag, size = 0x4, scoped, tag = 'scoped memory for tpu_custom_call.1']
    #allocation5 [shape = 'u8[196608]{0}', space=vmem, size = 0x30000, scoped, tag = 'input window, operand 1, single buffered']
    #allocation6 [shape = 's32[1]{0}', space=sflag, size = 0x4, scoped, tag = 'scoped memory for tpu_custom_call.1']
    #allocation7 [shape = 'u8[12288]{0}', space=vmem, size = 0x3000, scoped, tag = 'output window, operand 0, single buffered']
    %8 = vsyncpa [#allocation3], 0
    %9 = vsyncpa [#allocation6], 0
    %10 = vsyncpa [#allocation4], 0
    // Predicated region
    $region2: #{tpu_custom_call.1} parent=1 // pred_check
      _
    $region3: #{tpu_custom_call.1} parent=1 // pred_check_branch
      %12 = sbr.rel (0) target = $region5
    $region4: #{tpu_custom_call.1} parent=1 // pred_region
      %s14 = ssub.s32 128, 128
      %15 = vsyncadd [#allocation3], %s14
      %s17 = sshll.u32 [#allocation2], 4
      %s18 = int_to_ptr.vmem [resolvable:$true] %s17
      %20 = dma.hbm_to_vmem [thread:$0]  %s0, 128, %s18, [#allocation3]
    $region5: #{tpu_custom_call.1} parent=1 // pred_fallthru
      _
    // Predicated region
    $region6: #{tpu_custom_call.1} parent=1 // pred_check
      _
    $region7: #{tpu_custom_call.1} parent=1 // pred_check_branch
      %22 = sbr.rel (0) target = $region9
    $region8: #{tpu_custom_call.1} parent=1 // pred_region
      %s24 = ssub.s32 6144, 6144
      %25 = vsyncadd [#allocation6], %s24
      %s26 = sshll.u32 [#allocation5], 4
      %s27 = int_to_ptr.vmem [resolvable:$true] %s26
      %32 = dma.hbm_to_vmem [thread:$0]  %s1, 6144, %s27, [#allocation6], 384, 384, 24
    $region9: #{tpu_custom_call.1} parent=1 // pred_fallthru
      _
    // Predicated region
    $region10: #{tpu_custom_call.1} parent=1 // pred_check
      _
    $region11: #{tpu_custom_call.1} parent=1 // pred_check_branch
      %34 = sbr.rel (0) target = $region13
    $region12: #{tpu_custom_call.1} parent=1 // pred_region
      _
    $region13: #{tpu_custom_call.1} parent=1 // pred_fallthru
      _
    // Predicated region
    $region14: #{tpu_custom_call.1} parent=1 // pred_check
      _
    $region15: #{tpu_custom_call.1} parent=1 // pred_check_branch
      %36 = sbr.rel (0) target = $region17
    $region16: #{tpu_custom_call.1} parent=1 // pred_region
      %37 = dma.done [#allocation3], 128
    $region17: #{tpu_custom_call.1} parent=1 // pred_fallthru
      _
    // Predicated region
    $region18: #{tpu_custom_call.1} parent=1 // pred_check
      _
    $region19: #{tpu_custom_call.1} parent=1 // pred_check_branch
      %39 = sbr.rel (0) target = $region21
    $region20: #{tpu_custom_call.1} parent=1 // pred_region
      %40 = dma.done [#allocation6], 6144
    $region21: #{tpu_custom_call.1} parent=1 // pred_fallthru
      _
    %v41 = vld [vmem:[#allocation2] sm:$0xff]
    %v42 = vld [vmem:[#allocation5] sm:$0xff]
    %v43 = vld [vmem:[#allocation5 + $0x8] sm:$0xff]
    %v44 = vld [vmem:[#allocation5 + $0x10] sm:$0xff]
    %v45 = vld [vmem:[#allocation5 + $0x18] sm:$0xff]
    %v46 = vld [vmem:[#allocation5 + $0x20] sm:$0xff]
    %v47 = vld [vmem:[#allocation5 + $0x28] sm:$0xff]
    %v48 = vld [vmem:[#allocation5 + $0x30] sm:$0xff]
    %v49 = vld [vmem:[#allocation5 + $0x38] sm:$0xff]
    %v50 = vld [vmem:[#allocation5 + $0x40] sm:$0xff]
    %v51 = vld [vmem:[#allocation5 + $0x48] sm:$0xff]
    %v52 = vld [vmem:[#allocation5 + $0x50] sm:$0xff]
    %v53 = vld [vmem:[#allocation5 + $0x58] sm:$0xff]
    %v54 = vld [vmem:[#allocation5 + $0x60] sm:$0xff]
    %v55 = vld [vmem:[#allocation5 + $0x68] sm:$0xff]
    %v56 = vld [vmem:[#allocation5 + $0x70] sm:$0xff]
    %v57 = vld [vmem:[#allocation5 + $0x78] sm:$0xff]
    %v58 = vld [vmem:[#allocation5 + $0x80] sm:$0xff]
    %v59 = vld [vmem:[#allocation5 + $0x88] sm:$0xff]
    %v60 = vld [vmem:[#allocation5 + $0x90] sm:$0xff]
    %v61 = vld [vmem:[#allocation5 + $0x98] sm:$0xff]
    %v62 = vld [vmem:[#allocation5 + $0xa0] sm:$0xff]
    %v63 = vld [vmem:[#allocation5 + $0xa8] sm:$0xff]
    %v64 = vld [vmem:[#allocation5 + $0xb0] sm:$0xff]
    %v65 = vld [vmem:[#allocation5 + $0xb8] sm:$0xff]
    %v66 = vld [vmem:[#allocation5 + $0xc0] sm:$0xff]
    %v67 = vld [vmem:[#allocation5 + $0xc8] sm:$0xff]
    %v68 = vld [vmem:[#allocation5 + $0xd0] sm:$0xff]
    %v69 = vld [vmem:[#allocation5 + $0xd8] sm:$0xff]
    %v70 = vld [vmem:[#allocation5 + $0xe0] sm:$0xff]
    %v71 = vld [vmem:[#allocation5 + $0xe8] sm:$0xff]
    %v72 = vld [vmem:[#allocation5 + $0xf0] sm:$0xff]
    %v73 = vld [vmem:[#allocation5 + $0xf8] sm:$0xff]
    %v74 = vld [vmem:[#allocation5 + $0x100] sm:$0xff]
    %v75 = vld [vmem:[#allocation5 + $0x108] sm:$0xff]
    %v76 = vld [vmem:[#allocation5 + $0x110] sm:$0xff]
    %v77 = vld [vmem:[#allocation5 + $0x118] sm:$0xff]
    %v78 = vld [vmem:[#allocation5 + $0x120] sm:$0xff]
    %v79 = vld [vmem:[#allocation5 + $0x128] sm:$0xff]
    %v80 = vld [vmem:[#allocation5 + $0x130] sm:$0xff]
    %v81 = vld [vmem:[#allocation5 + $0x138] sm:$0xff]
    %v82 = vld [vmem:[#allocation5 + $0x140] sm:$0xff]
    %v83 = vld [vmem:[#allocation5 + $0x148] sm:$0xff]
    %v84 = vld [vmem:[#allocation5 + $0x150] sm:$0xff]
    %v85 = vld [vmem:[#allocation5 + $0x158] sm:$0xff]
    %v86 = vld [vmem:[#allocation5 + $0x160] sm:$0xff]
    %v87 = vld [vmem:[#allocation5 + $0x168] sm:$0xff]
    %v88 = vld [vmem:[#allocation5 + $0x170] sm:$0xff]
    %v89 = vld [vmem:[#allocation5 + $0x178] sm:$0xff]
    %v90 = vld [vmem:[%s2] sm:$0x7]
    %v92 = vlaneseq
    %v93 = vshrl.u32 %v92, 7
    %v94 = vsub.s32 0, %v93
    %v95 = vrot.slane %v90, %v94
    %v96 = vlaneseq
    %v97 = vshrl.u32 %v96, 7
    %v98 = vsub.s32 1, %v97
    %v99 = vrot.slane %v90, %v98
    %v100 = vlaneseq
    %v101 = vshrl.u32 %v100, 7
    %v102 = vsub.s32 2, %v101
    %v103 = vrot.slane %v90, %v102
    %107 = vmatprep.subr.mxu0 %v43
    %108 = vmatpush1.msra.mxu0 %v42
    %109 = vmatprep.subr.mxu0 %v46
    %110 = vmatpush1.msra.mxu0 %v45
    %111 = vmatprep.subr.mxu0 %v49
    %112 = vmatpush1.msra.mxu0 %v48
    %113 = vmatprep.subr.mxu0 %v52
    %114 = vmatpush1.msra.mxu0 %v51
    %115 = vmatprep.subr.mxu0 %v55
    %116 = vmatpush1.msra.mxu0 %v54
    %117 = vmatprep.subr.mxu0 %v58
    %118 = vmatpush1.msra.mxu0 %v57
    %119 = vmatprep.subr.mxu0 %v61
    %120 = vmatpush1.msra.mxu0 %v60
    %121 = vmatprep.subr.mxu0 %v64
    %122 = vmatpush1.msra.mxu0 %v63
    %123 = vmatprep.subr.mxu0 %v67
    %124 = vmatpush1.msra.mxu0 %v66
    %125 = vmatprep.subr.mxu0 %v70
    %126 = vmatpush1.msra.mxu0 %v69
    %127 = vmatprep.subr.mxu0 %v73
    %128 = vmatpush1.msra.mxu0 %v72
    %129 = vmatprep.subr.mxu0 %v76
    %130 = vmatpush1.msra.mxu0 %v75
    %131 = vmatprep.subr.mxu0 %v79
    %132 = vmatpush1.msra.mxu0 %v78
    %133 = vmatprep.subr.mxu0 %v82
    %134 = vmatpush1.msra.mxu0 %v81
    %135 = vmatprep.subr.mxu0 %v85
    %136 = vmatpush1.msra.mxu0 %v84
    %137 = vmatprep.subr.mxu0 %v88
    %138 = vmatpush1.msra.mxu0 %v87
    %139 = vmatprep.subr.mxu0 0.0
    %140 = vmatpush1.msra.mxu0 0.0
    %141 = vmatprep.subr.mxu0 0.0
    %142 = vmatpush1.msra.mxu0 0.0
    %143 = vmatprep.subr.mxu0 0.0
    %144 = vmatpush1.msra.mxu0 0.0
    %145 = vmatprep.subr.mxu0 0.0
    %146 = vmatpush1.msra.mxu0 0.0
    %147 = vmatprep.subr.mxu0 0.0
    %148 = vmatpush1.msra.mxu0 0.0
    %149 = vmatprep.subr.mxu0 0.0
    %150 = vmatpush1.msra.mxu0 0.0
    %151 = vmatprep.subr.mxu0 0.0
    %152 = vmatpush1.msra.mxu0 0.0
    %153 = vmatprep.subr.mxu0 0.0
    %154 = vmatpush1.msra.mxu0 0.0
    %155 = vmatprep.subr.mxu0 0.0
    %156 = vmatpush1.msra.mxu0 0.0
    %157 = vmatprep.subr.mxu0 0.0
    %158 = vmatpush1.msra.mxu0 0.0
    %159 = vmatprep.subr.mxu0 0.0
    %160 = vmatpush1.msra.mxu0 0.0
    %161 = vmatprep.subr.mxu0 0.0
    %162 = vmatpush1.msra.mxu0 0.0
    %163 = vmatprep.subr.mxu0 0.0
    %164 = vmatpush1.msra.mxu0 0.0
    %165 = vmatprep.subr.mxu0 0.0
    %166 = vmatpush1.msra.mxu0 0.0
    %167 = vmatprep.subr.mxu0 0.0
    %168 = vmatpush1.msra.mxu0 0.0
    %169 = vmatprep.subr.mxu0 0.0
    %170 = vmatpush1.msra.mxu0 0.0
    %171 = vmatprep.mubr.f32.mxu0 0.0
    %172 = vmatmul.mubr.f32.gmra.mrb[0].mxu0 %v41
    %v173 = vpop.f32.mrb[0].mxu0
    %v174 = vadd.f32 %v95, %v173
    %v175 = vpop.f32.mrb[0].mxu0
    %v176 = vadd.f32 %v99, %v175
    %177 = vdwg.mxu0
    %178 = vmatprep.subr.mxu0 0.0
    %179 = vmatpush1.msra.mxu0 %v44
    %180 = vmatprep.subr.mxu0 0.0
    %181 = vmatpush1.msra.mxu0 %v47
    %182 = vmatprep.subr.mxu0 0.0
    %183 = vmatpush1.msra.mxu0 %v50
    %184 = vmatprep.subr.mxu0 0.0
    %185 = vmatpush1.msra.mxu0 %v53
    %186 = vmatprep.subr.mxu0 0.0
    %187 = vmatpush1.msra.mxu0 %v56
    %188 = vmatprep.subr.mxu0 0.0
    %189 = vmatpush1.msra.mxu0 %v59
    %190 = vmatprep.subr.mxu0 0.0
    %191 = vmatpush1.msra.mxu0 %v62
    %192 = vmatprep.subr.mxu0 0.0
    %193 = vmatpush1.msra.mxu0 %v65
    %194 = vmatprep.subr.mxu0 0.0
    %195 = vmatpush1.msra.mxu0 %v68
    %196 = vmatprep.subr.mxu0 0.0
    %197 = vmatpush1.msra.mxu0 %v71
    %198 = vmatprep.subr.mxu0 0.0
    %199 = vmatpush1.msra.mxu0 %v74
    %200 = vmatprep.subr.mxu0 0.0
    %201 = vmatpush1.msra.mxu0 %v77
    %202 = vmatprep.subr.mxu0 0.0
    %203 = vmatpush1.msra.mxu0 %v80
    %204 = vmatprep.subr.mxu0 0.0
    %205 = vmatpush1.msra.mxu0 %v83
    %206 = vmatprep.subr.mxu0 0.0
    %207 = vmatpush1.msra.mxu0 %v86
    %208 = vmatprep.subr.mxu0 0.0
    %209 = vmatpush1.msra.mxu0 %v89
    %210 = vmatprep.subr.mxu0 0.0
    %211 = vmatpush1.msra.mxu0 0.0
    %212 = vmatprep.subr.mxu0 0.0
    %213 = vmatpush1.msra.mxu0 0.0
    %214 = vmatprep.subr.mxu0 0.0
    %215 = vmatpush1.msra.mxu0 0.0
    %216 = vmatprep.subr.mxu0 0.0
    %217 = vmatpush1.msra.mxu0 0.0
    %218 = vmatprep.subr.mxu0 0.0
    %219 = vmatpush1.msra.mxu0 0.0
    %220 = vmatprep.subr.mxu0 0.0
    %221 = vmatpush1.msra.mxu0 0.0
    %222 = vmatprep.subr.mxu0 0.0
    %223 = vmatpush1.msra.mxu0 0.0
    %224 = vmatprep.subr.mxu0 0.0
    %225 = vmatpush1.msra.mxu0 0.0
    %226 = vmatprep.subr.mxu0 0.0
    %227 = vmatpush1.msra.mxu0 0.0
    %228 = vmatprep.subr.mxu0 0.0
    %229 = vmatpush1.msra.mxu0 0.0
    %230 = vmatprep.subr.mxu0 0.0
    %231 = vmatpush1.msra.mxu0 0.0
    %232 = vmatprep.subr.mxu0 0.0
    %233 = vmatpush1.msra.mxu0 0.0
    %234 = vmatprep.subr.mxu0 0.0
    %235 = vmatpush1.msra.mxu0 0.0
    %236 = vmatprep.subr.mxu0 0.0
    %237 = vmatpush1.msra.mxu0 0.0
    %238 = vmatprep.subr.mxu0 0.0
    %239 = vmatpush1.msra.mxu0 0.0
    %240 = vmatprep.subr.mxu0 0.0
    %241 = vmatpush1.msra.mxu0 0.0
    %242 = vmatprep.mubr.f32.mxu0 0.0
    %243 = vmatmul.mubr.f32.gmra.mrb[0].mxu0 %v41
    %v244 = vpop.f32.mrb[0].mxu0
    %v245 = vadd.f32 %v103, %v244
    %v246 = vpop.f32.mrb[0].mxu0
    %247 = vdwg.mxu0
    %248 = vst [vmem:[#allocation7] sm:$0xff] %v174
    %249 = vst [vmem:[#allocation7 + $0x8] sm:$0xff] %v176
    %250 = vst [vmem:[#allocation7 + $0x10] sm:$0xff] %v245
    // Predicated region
    $region22: #{tpu_custom_call.1} parent=1 // pred_check
      _
    $region23: #{tpu_custom_call.1} parent=1 // pred_check_branch
      %252 = sbr.rel (0) target = $region25
    $region24: #{tpu_custom_call.1} parent=1 // pred_region
      %s254 = ssub.s32 384, 384
      %255 = vsyncadd [#allocation4], %s254
      %s257 = sshll.u32 [#allocation7], 4
      %s258 = int_to_ptr.vmem [resolvable:$true] %s257
      %260 = dma.vmem_to_hbm [thread:$0]  %s258, 384, %s3, [#allocation4]
    $region25: #{tpu_custom_call.1} parent=1 // pred_fallthru
      _
    // Predicated region
    $region26: #{tpu_custom_call.1} parent=1 // pred_check
      _
    $region27: #{tpu_custom_call.1} parent=1 // pred_check_branch
      %262 = sbr.rel (0) target = $region29
    $region28: #{tpu_custom_call.1} parent=1 // pred_region
      %263 = dma.done [#allocation4], 384
    $region29: #{tpu_custom_call.1} parent=1 // pred_fallthru
      _
    %264 = vsyncpa [#allocation3], 1
    %265 = vsyncpa [#allocation6], 1
    %266 = vsyncpa [#allocation4], 1

</llo_original>
